<compile_context>
chip_gen: v7x
topology: tpu7x:2x2x1
jax: 0.10.0
libtpu: 0.0.40
codegen_flags: <defaults>
</compile_context>

<pallas_src>
import functools

import jax
import jax.numpy as jnp
from jax.experimental import pallas as pl
from jax.experimental.pallas import tpu as pltpu


def _round_up(x: int, m: int) -> int:
    return ((x + m - 1) // m) * m


def _cdiv(a: int, b: int) -> int:
    return -(-a // b)


_MAX_TILE_B = 512                    # rows per block upper bound
_PER_BUFFER_BYTES = 8 * 1024 * 1024  # logits VMEM buffer budget (x2 for double-buffering)


def _tpu_vmem_capacity() -> int:
    """Per-core VMEM bytes; conservative (v7x-like) fallback if query fails."""
    try:
        return int(pltpu.get_tpu_info().vmem_capacity_bytes)
    except Exception:  # noqa: BLE001 - robustness across jax versions
        return 64 * 1024 * 1024


def _ce_kernel(logits_ref, targets_ref, nll_ref, m_ref, l_ref, t_ref, *,
               tile_c, num_classes, mask_last_tile):
    """Streaming logsumexp + one-hot target gather over class tiles.

    grid = (num_B_tiles [parallel], num_C_tiles [arbitrary, innermost]).
    m/l/t scratch persist across the class axis; nll is written on the last
    class tile (init/finalize accumulator pattern).
    """
    j = pl.program_id(1)

    @pl.when(j == 0)
    def _():
        m_ref[...] = jnp.full_like(m_ref, -jnp.inf)
        l_ref[...] = jnp.zeros_like(l_ref)
        t_ref[...] = jnp.zeros_like(t_ref)

    # Upcast inside the kernel (HBM traffic stays native dtype).
    logits = logits_ref[...].astype(jnp.float32)           # (tile_b, tile_c)

    # (1, tile_c) lane iota (not a full (tile_b, tile_c) broadcasted iota).
    lane = jax.lax.broadcasted_iota(jnp.int32, (1, tile_c), 1)

    if mask_last_tile:
        # Only emitted (statically) when C % tile_c != 0: kills out-of-bounds
        # garbage in the ragged last class tile before max/exp.  On full tiles
        # the mask is all-True (cost: one select/elem, unaligned shapes only).
        valid = lane < (num_classes - j * tile_c)           # (1, tile_c)
        logits = jnp.where(valid, logits, -jnp.inf)

    # Online, numerically stable logsumexp over the class (lane) axis.
    tile_max = jnp.max(logits, axis=-1, keepdims=True)      # (tile_b, 1)
    m_new = jnp.maximum(m_ref[...], tile_max)
    scale = jnp.exp(m_ref[...] - m_new)                     # per-row only
    l_ref[...] = l_ref[...] * scale + jnp.sum(
        jnp.exp(logits - m_new), axis=-1, keepdims=True)
    m_ref[...] = m_new

    # Target-class logit via one-hot select (no dynamic gather on TPU).
    # Per-element add folded to per-row: compare lane iota vs localized target.
    # Out-of-range (masked / garbage) columns can never match a valid target,
    # so no extra masking is needed here.
    local_tgt = targets_ref[...] - j * tile_c                # (tile_b, 1) int32
    onehot = lane == local_tgt                               # (tile_b, tile_c)
    t_ref[...] += jnp.sum(jnp.where(onehot, logits, 0.0),
                          axis=-1, keepdims=True)

    @pl.when(j == pl.num_programs(1) - 1)
    def _():
        nll_ref[...] = (m_ref[...] + jnp.log(l_ref[...]) - t_ref[...]
                        ).astype(nll_ref.dtype)


def my_loss(output_batch: jax.Array, target_batch: jax.Array, *,
            max_block_rows: int | None = None,
            max_block_classes: int | None = None) -> jax.Array:
    """Mean cross-entropy of logits `output_batch` [B, C] vs int labels [B]."""
    B, C = output_batch.shape
    logits = output_batch                                   # native dtype HBM reads
    targets2d = target_batch.astype(jnp.int32).reshape(B, 1)

    vmem_cap = _tpu_vmem_capacity()
    dual_core = vmem_cap <= 64 * 1024 * 1024   # v7x heuristic: 64 MiB/TC, 2 TCs/chip
    itemsize = jnp.dtype(logits.dtype).itemsize

    # --- batch tile -------------------------------------------------------
    tile_b_cap = _MAX_TILE_B if max_block_rows is None else max(
        8, (max_block_rows // 8) * 8)
    tile_b = min(_round_up(B, 8), tile_b_cap)
    if dual_core and B > 8:
        # Guarantee >=2 (ideally 4) batch tiles so the "parallel" axis shards
        # across both v7x TensorCores.
        n_bt = min(4, _cdiv(B, 8))
        tile_b = min(tile_b, _round_up(_cdiv(B, n_bt), 8))
    if tile_b >= B:
        tile_b = B                      # full-extent block: no padded rows at all

    # --- class tile (largest that fits the per-buffer budget) --------------
    tile_c_cap = max(128, (_PER_BUFFER_BYTES // (tile_b * itemsize)) // 128 * 128)
    if max_block_classes is not None:
        tile_c_cap = min(tile_c_cap, max(128, (max_block_classes // 128) * 128))
    tile_c = min(_round_up(C, 128), tile_c_cap)
    if tile_c >= C:
        tile_c = C                      # full-extent block: no ragged last tile

    grid = (_cdiv(B, tile_b), _cdiv(C, tile_c))
    mask_last = (C % tile_c) != 0

    kernel = functools.partial(_ce_kernel, tile_c=tile_c, num_classes=C,
                               mask_last_tile=mask_last)

    cost = pl.CostEstimate(
        flops=6 * B * C,
        transcendentals=B * C + B,
        bytes_accessed=B * C * itemsize + 2 * B * 4,
    )

    vmem_limit = (40 if dual_core else 64) * 1024 * 1024

    nll = pl.pallas_call(
        kernel,
        out_shape=jax.ShapeDtypeStruct((B, 1), jnp.float32),
        grid_spec=pltpu.PrefetchScalarGridSpec(
            num_scalar_prefetch=0,
            grid=grid,
            in_specs=[
                # Logits: tiled over batch x classes; default double-buffering.
                pl.BlockSpec((tile_b, tile_c), lambda i, j: (i, j)),
                # Targets: block index constant across the inner class axis,
                # so the narrow (tile_b, 1) DMA happens once per batch tile.
                pl.BlockSpec((tile_b, 1), lambda i, j: (i, 0)),
            ],
            out_specs=pl.BlockSpec((tile_b, 1), lambda i, j: (i, 0)),
            scratch_shapes=[pltpu.VMEM((tile_b, 1), jnp.float32)] * 3,  # m, l, tgt
        ),
        compiler_params=pltpu.CompilerParams(
            dimension_semantics=("parallel", "arbitrary"),
            vmem_limit_bytes=vmem_limit,
        ),
        cost_estimate=cost,
    )(logits, targets2d)

    # Tiny final reduction (rows past B, if any partial batch tile existed,
    # never reach here because nll has exactly B rows).
    return jnp.sum(nll[:, 0]) / B


def _ref_loss(output_batch, target_batch):
    logp = jax.nn.log_softmax(output_batch.astype(jnp.float32), axis=-1)
    return -jnp.mean(jnp.take_along_axis(logp, target_batch[:, None], axis=-1))


if __name__ == "__main__":
    key = jax.random.PRNGKey(0)
    k1, k2, k3, k4, k5, k6 = jax.random.split(key, 6)

    # Case 1: small aligned-ish, single tile in both dims.
    B, C = 8, 32
    x1 = jax.random.normal(k1, (B, C), dtype=jnp.float32)
    t1 = jax.random.randint(k2, (B,), 0, C, dtype=jnp.int32)
    loss1 = my_loss(x1, t1)
    jax.block_until_ready(loss1)
    ref1 = _ref_loss(x1, t1)
    assert jnp.allclose(loss1, ref1, rtol=1e-5, atol=1e-5), (loss1, ref1)

    # Case 2: unaligned B and C, forced small tiles -> exercises the cdiv grid,
    # partial last batch block, streaming logsumexp across class tiles, and the
    # ragged-last-class-tile mask (200 % 128 != 0).
    B2, C2 = 12, 200
    x2 = jax.random.normal(k3, (B2, C2), dtype=jnp.float32)
    t2 = jax.random.randint(k4, (B2,), 0, C2, dtype=jnp.int32)
    loss2 = my_loss(x2, t2, max_block_rows=8, max_block_classes=128)
    jax.block_until_ready(loss2)
    ref2 = _ref_loss(x2, t2)
    assert jnp.allclose(loss2, ref2, rtol=1e-5, atol=1e-5), (loss2, ref2)

    # Case 3: bf16 logits (native-dtype HBM reads, in-kernel upcast), multiple
    # class tiles with a ragged last tile.
    B3, C3 = 16, 300
    x3 = jax.random.normal(k5, (B3, C3), dtype=jnp.float32).astype(jnp.bfloat16)
    t3 = jax.random.randint(k6, (B3,), 0, C3, dtype=jnp.int32)
    loss3 = my_loss(x3, t3, max_block_classes=128)
    jax.block_until_ready(loss3)
    ref3 = _ref_loss(x3, t3)
    assert jnp.allclose(loss3, ref3, rtol=1e-3, atol=1e-3), (loss3, ref3)

    print("KERNEL_OK")
</pallas_src>

<mosaic_0001>
module attributes {stable_mosaic.version = 11 : i64} {
  func.func @_ce_kernel(%arg0: i32, %arg1: i32, %arg2: memref<8x32xf32, #tpu.memory_space<vmem>>, %arg3: memref<8x1xi32, #tpu.memory_space<vmem>>, %arg4: memref<8x1xf32, #tpu.memory_space<vmem>>, %arg5: memref<8x1xf32, #tpu.memory_space<vmem>>, %arg6: memref<8x1xf32, #tpu.memory_space<vmem>>, %arg7: memref<8x1xf32, #tpu.memory_space<vmem>>) attributes {dimension_semantics = [#tpu.dimension_semantics<parallel>, #tpu.dimension_semantics<arbitrary>], iteration_bounds = array<i64: 1, 1>, scalar_prefetch = 0 : i64, scratch_operands = 3 : i64, tpu.core_type = #tpu.core_type<tc>, window_params = [{transform_indices = @transform_0, window_bounds = array<i64: 8, 32>}, {transform_indices = @transform_1, window_bounds = array<i64: 8, 1>}, {transform_indices = @transform_2, window_bounds = array<i64: 8, 1>}]} {
    %c0_i32 = arith.constant 0 : i32
    %0 = arith.cmpi eq, %arg1, %c0_i32 : i32
    %1 = arith.extui %0 : i1 to i32
    %c0_i32_0 = arith.constant 0 : i32
    %2 = arith.cmpi ne, %1, %c0_i32_0 : i32
    scf.if %2 {
      %cst_23 = arith.constant 0xFF800000 : f32
      %39 = vector.broadcast %cst_23 : f32 to vector<8x1xf32>
      %c0_24 = arith.constant 0 : index
      %c0_25 = arith.constant 0 : index
      %40 = vector.load %arg5[%c0_24, %c0_25] : memref<8x1xf32, #tpu.memory_space<vmem>>, vector<8x1xf32>
      tpu.vector_store %arg5[%c0_24, %c0_25], %39 {strides = array<i32>} : memref<8x1xf32, #tpu.memory_space<vmem>>, vector<8x1xf32>,
      %cst_26 = arith.constant 0.000000e+00 : f32
      %41 = vector.broadcast %cst_26 : f32 to vector<8x1xf32>
      %c0_27 = arith.constant 0 : index
      %c0_28 = arith.constant 0 : index
      %42 = vector.load %arg6[%c0_27, %c0_28] : memref<8x1xf32, #tpu.memory_space<vmem>>, vector<8x1xf32>
      tpu.vector_store %arg6[%c0_27, %c0_28], %41 {strides = array<i32>} : memref<8x1xf32, #tpu.memory_space<vmem>>, vector<8x1xf32>,
      %cst_29 = arith.constant 0.000000e+00 : f32
      %43 = vector.broadcast %cst_29 : f32 to vector<8x1xf32>
      %c0_30 = arith.constant 0 : index
      %c0_31 = arith.constant 0 : index
      %44 = vector.load %arg7[%c0_30, %c0_31] : memref<8x1xf32, #tpu.memory_space<vmem>>, vector<8x1xf32>
      tpu.vector_store %arg7[%c0_30, %c0_31], %43 {strides = array<i32>} : memref<8x1xf32, #tpu.memory_space<vmem>>, vector<8x1xf32>,
    } else {
    }
    %c0 = arith.constant 0 : index
    %c0_1 = arith.constant 0 : index
    %3 = vector.load %arg2[%c0, %c0_1] : memref<8x32xf32, #tpu.memory_space<vmem>>, vector<8x32xf32>
    %4 = tpu.iota {dimensions = array<i32: 1>} : vector<1x32xi32>
    %cst = arith.constant dense<0xFF800000> : vector<8xf32>
    %5 = vector.multi_reduction <maximumf>, %3, %cst [1] : vector<8x32xf32> to vector<8xf32>
    %6 = vector.shape_cast %5 : vector<8xf32> to vector<8x1xf32>
    %c0_2 = arith.constant 0 : index
    %c0_3 = arith.constant 0 : index
    %7 = vector.load %arg5[%c0_2, %c0_3] : memref<8x1xf32, #tpu.memory_space<vmem>>, vector<8x1xf32>
    %8 = arith.maximumf %7, %6 : vector<8x1xf32>
    %c0_4 = arith.constant 0 : index
    %c0_5 = arith.constant 0 : index
    %9 = vector.load %arg5[%c0_4, %c0_5] : memref<8x1xf32, #tpu.memory_space<vmem>>, vector<8x1xf32>
    %10 = arith.subf %9, %8 : vector<8x1xf32>
    %11 = math.exp %10 : vector<8x1xf32>
    %c0_6 = arith.constant 0 : index
    %c0_7 = arith.constant 0 : index
    %12 = vector.load %arg6[%c0_6, %c0_7] : memref<8x1xf32, #tpu.memory_space<vmem>>, vector<8x1xf32>
    %13 = arith.mulf %12, %11 : vector<8x1xf32>
    %14 = vector.broadcast %8 : vector<8x1xf32> to vector<8x32xf32>
    %15 = arith.subf %3, %14 : vector<8x32xf32>
    %16 = math.exp %15 : vector<8x32xf32>
    %cst_8 = arith.constant dense<0.000000e+00> : vector<8xf32>
    %17 = vector.multi_reduction <add>, %16, %cst_8 [1] : vector<8x32xf32> to vector<8xf32>
    %18 = vector.shape_cast %17 : vector<8xf32> to vector<8x1xf32>
    %19 = arith.addf %13, %18 : vector<8x1xf32>
    %c0_9 = arith.constant 0 : index
    %c0_10 = arith.constant 0 : index
    %20 = vector.load %arg6[%c0_9, %c0_10] : memref<8x1xf32, #tpu.memory_space<vmem>>, vector<8x1xf32>
    tpu.vector_store %arg6[%c0_9, %c0_10], %19 {strides = array<i32>} : memref<8x1xf32, #tpu.memory_space<vmem>>, vector<8x1xf32>,
    %c0_11 = arith.constant 0 : index
    %c0_12 = arith.constant 0 : index
    %21 = vector.load %arg5[%c0_11, %c0_12] : memref<8x1xf32, #tpu.memory_space<vmem>>, vector<8x1xf32>
    tpu.vector_store %arg5[%c0_11, %c0_12], %8 {strides = array<i32>} : memref<8x1xf32, #tpu.memory_space<vmem>>, vector<8x1xf32>,
    %c0_13 = arith.constant 0 : index
    %c0_14 = arith.constant 0 : index
    %22 = vector.load %arg3[%c0_13, %c0_14] : memref<8x1xi32, #tpu.memory_space<vmem>>, vector<8x1xi32>
    %c32_i32 = arith.constant 32 : i32
    %23 = arith.muli %arg1, %c32_i32 : i32
    %24 = vector.broadcast %23 : i32 to vector<8x1xi32>
    %25 = arith.subi %22, %24 : vector<8x1xi32>
    %26 = vector.broadcast %4 : vector<1x32xi32> to vector<8x32xi32>
    %27 = vector.broadcast %25 : vector<8x1xi32> to vector<8x32xi32>
    %28 = arith.cmpi eq, %26, %27 : vector<8x32xi32>
    %c0_15 = arith.constant 0 : index
    %c0_16 = arith.constant 0 : index
    %29 = vector.load %arg7[%c0_15, %c0_16] : memref<8x1xf32, #tpu.memory_space<vmem>>, vector<8x1xf32>
    %cst_17 = arith.constant 0.000000e+00 : f32
    %30 = vector.broadcast %cst_17 : f32 to vector<8x32xf32>
    %31 = arith.select %28, %3, %30 : vector<8x32xi1>, vector<8x32xf32>
    %cst_18 = arith.constant dense<0.000000e+00> : vector<8xf32>
    %32 = vector.multi_reduction <add>, %31, %cst_18 [1] : vector<8x32xf32> to vector<8xf32>
    %33 = vector.shape_cast %32 : vector<8xf32> to vector<8x1xf32>
    %34 = arith.addf %29, %33 : vector<8x1xf32>
    %c0_19 = arith.constant 0 : index
    %c0_20 = arith.constant 0 : index
    %35 = vector.load %arg7[%c0_19, %c0_20] : memref<8x1xf32, #tpu.memory_space<vmem>>, vector<8x1xf32>
    tpu.vector_store %arg7[%c0_19, %c0_20], %34 {strides = array<i32>} : memref<8x1xf32, #tpu.memory_space<vmem>>, vector<8x1xf32>,
    %c0_i32_21 = arith.constant 0 : i32
    %36 = arith.cmpi eq, %arg1, %c0_i32_21 : i32
    %37 = arith.extui %36 : i1 to i32
    %c0_i32_22 = arith.constant 0 : i32
    %38 = arith.cmpi ne, %37, %c0_i32_22 : i32
    scf.if %38 {
      %c0_23 = arith.constant 0 : index
      %c0_24 = arith.constant 0 : index
      %39 = vector.load %arg5[%c0_23, %c0_24] : memref<8x1xf32, #tpu.memory_space<vmem>>, vector<8x1xf32>
      %c0_25 = arith.constant 0 : index
      %c0_26 = arith.constant 0 : index
      %40 = vector.load %arg6[%c0_25, %c0_26] : memref<8x1xf32, #tpu.memory_space<vmem>>, vector<8x1xf32>
      %41 = math.log %40 : vector<8x1xf32>
      %42 = arith.addf %39, %41 : vector<8x1xf32>
      %c0_27 = arith.constant 0 : index
      %c0_28 = arith.constant 0 : index
      %43 = vector.load %arg7[%c0_27, %c0_28] : memref<8x1xf32, #tpu.memory_space<vmem>>, vector<8x1xf32>
      %44 = arith.subf %42, %43 : vector<8x1xf32>
      %c0_29 = arith.constant 0 : index
      %c0_30 = arith.constant 0 : index
      %45 = vector.load %arg4[%c0_29, %c0_30] : memref<8x1xf32, #tpu.memory_space<vmem>>, vector<8x1xf32>
      tpu.vector_store %arg4[%c0_29, %c0_30], %44 {strides = array<i32>} : memref<8x1xf32, #tpu.memory_space<vmem>>, vector<8x1xf32>,
    } else {
    }
    return
  }
  func.func @transform_0(%arg0: i32, %arg1: i32) -> (i32, i32) {
    %c0_i32 = arith.constant 0 : i32
    return %arg0, %arg1 : i32, i32
  }
  func.func @transform_1(%arg0: i32, %arg1: i32) -> (i32, i32) {
    %c0_i32 = arith.constant 0 : i32
    %c0_i32_0 = arith.constant 0 : i32
    return %arg0, %c0_i32 : i32, i32
  }
  func.func @transform_2(%arg0: i32, %arg1: i32) -> (i32, i32) {
    %c0_i32 = arith.constant 0 : i32
    %c0_i32_0 = arith.constant 0 : i32
    return %arg0, %c0_i32 : i32, i32
  }
}

</mosaic_0001>

<llo_original>
// kernel: tpu_custom_call.1
$region0: #{tpu_custom_call.1}
  #allocation0 [shape = 'u32[]', space=smem, size = 0x4, offset = 0x4, fixed_abs, tag = 'smem constant byte address 0x4 - core index']
  #allocation1 [shape = 'u32[144,128]{1,0:T(1,128)}', space=vmem, size = 0x12000, scoped, tag = 'internal scratch']
  #allocation2 [shape = 'f32[8,1]{1,0:T(8,128)}', space=vmem, size = 0x1000, scoped, tag = 'scratch operand']
  #allocation3 [shape = 'f32[8,1]{1,0:T(8,128)}', space=vmem, size = 0x1000, scoped, tag = 'scratch operand']
  #allocation4 [shape = 'f32[8,1]{1,0:T(8,128)}', space=vmem, size = 0x1000, scoped, tag = 'scratch operand']
  %s0 = inlined_call_operand.vmem [shape: f32[8,32], index: 0, kind: input, shape index: {}]
  %s1 = inlined_call_operand.vmem [shape: s32[8,1], index: 1, kind: input, shape index: {}]
  %s2 = inlined_call_operand.vmem [shape: f32[8,1], index: 2, kind: output, shape index: {}]
  %s3 = sld [smem:[#allocation0]]
  $region26: #{tpu_custom_call.1} parent=0
    _
  %s5 = ssub.s32 1, %s3
  %s6 = scalar_select 0, %s5, %s3
  // Predicated region
  $region2: #{tpu_custom_call.1} parent=0 // pred_check
    _
  $region3: #{tpu_custom_call.1} parent=0 // pred_check_branch
    %8 = sbr.rel (0) target = $region5
  $region4: #{tpu_custom_call.1} parent=0 // pred_region
    _
  $region5: #{tpu_custom_call.1} parent=0 // pred_fallthru
    _
  // Predicated region
  $region6: #{tpu_custom_call.1} parent=0 // pred_check
    _
  $region7: #{tpu_custom_call.1} parent=0 // pred_check_branch
    %10 = sbr.rel (0) target = $region9
  $region8: #{tpu_custom_call.1} parent=0 // pred_region
    _
  $region9: #{tpu_custom_call.1} parent=0 // pred_fallthru
    _
  %p11 = scmp.eq.s32.totalorder 0, 0
  // Predicated region
  $region10: #{tpu_custom_call.1} parent=0 // pred_check
    %p12 = pneg %p11
  $region11: #{tpu_custom_call.1} parent=0 // pred_check_branch
    %14 = sbr.rel (%p12) target = $region13
  $region12: #{tpu_custom_call.1} parent=0 // pred_region
    %vm15 = vcmask 7168
    %16 = vst.msk [vmem:[#allocation2] sm:$0xff] %vm15, -inf
    %17 = vst.msk [vmem:[#allocation3] sm:$0xff] %vm15, 0.0
    %18 = vst.msk [vmem:[#allocation4] sm:$0xff] %vm15, 0.0
  $region13: #{tpu_custom_call.1} parent=0 // pred_fallthru
    _
  %v19 = vld [vmem:[%s0] sm:$0xff]
  %v20 = vlaneseq
  %v21 = vand.u32 %v20, 127
  %vm22 = vcmask 261120
  %v23 = vsel %vm22, %v19, -inf
  %24 = vmax.xlane.f32.xlu0 %v23
  %v25 = vpop.xlane.xlu0 %24
  %v26 = vld [vmem:[#allocation2] sm:$0xff]
  %v27 = vmax.f32 %v26, %v25
  %v28 = vsub.f32 %v26, %v27
  %v29 = vmul.f32 %v28, 1.442695
  %v30 = vpow.pop %v29
  %v31 = vld [vmem:[#allocation3] sm:$0xff]
  %v32 = vmul.f32 %v31, %v30
  %34 = vset.pattern.permute.xlu0 0
  %35 = vperm.xlu0 %34, %v27
  %v36 = vpop.permute.xlu0 %35
  %v38 = vsub.f32 %v19, %v36
  %v39 = vmul.f32 %v38, 1.442695
  %v40 = vpow.pop %v39
  %v41 = vsel %vm22, %v40, 0.0
  %42 = vadd.xlane.f32.xlu0 %v41
  %v43 = vpop.xlane.xlu0 %42
  %v44 = vadd.f32 %v32, %v43
  %vm45 = vcmask 7168
  %46 = vst.msk [vmem:[#allocation3] sm:$0xff] %vm45, %v44
  %47 = vst.msk [vmem:[#allocation2] sm:$0xff] %vm45, %v27
  %v48 = vld [vmem:[%s1] sm:$0xff]
  %s49 = smul.u32 0, 32
  %v50 = vstv %s49
  %v51 = vsub.s32 %v48, %v50
  %52 = vset.pattern.permute.xlu0 0
  %53 = vperm.xlu0 %52, %v51
  %v54 = vpop.permute.xlu0 %53
  %vm55 = vcmp.eq.s32.totalorder %v21, %v54
  %v56 = vld [vmem:[#allocation4] sm:$0xff]
  %v57 = vsel %vm55, %v19, 0.0
  %v58 = vsel %vm22, %v57, 0.0
  %59 = vadd.xlane.f32.xlu0 %v58
  %v60 = vpop.xlane.xlu0 %59
  %v61 = vadd.f32 %v56, %v60
  %62 = vst.msk [vmem:[#allocation4] sm:$0xff] %vm45, %v61
  // Predicated region
  $region14: #{tpu_custom_call.1} parent=0 // pred_check
    %p63 = pneg %p11
  $region15: #{tpu_custom_call.1} parent=0 // pred_check_branch
    %65 = sbr.rel (%p63) target = $region17
  $region16: #{tpu_custom_call.1} parent=0 // pred_region
    %v66 = vld [vmem:[#allocation2] sm:$0xff]
    %v67 = vld [vmem:[#allocation3] sm:$0xff]
    %v68 = vlog2.pop %v67
    %v69 = vmul.f32 %v68, 0.6931472
    %v70 = vadd.f32 %v66, %v69
    %v71 = vld [vmem:[#allocation4] sm:$0xff]
    %v72 = vsub.f32 %v70, %v71
    %73 = vst.msk [vmem:[%s2] sm:$0xff] %vm45, %v72
  $region17: #{tpu_custom_call.1} parent=0 // pred_fallthru
    _
  // Predicated region
  $region18: #{tpu_custom_call.1} parent=0 // pred_check
    _
  $region19: #{tpu_custom_call.1} parent=0 // pred_check_branch
    %75 = sbr.rel (0) target = $region21
  $region20: #{tpu_custom_call.1} parent=0 // pred_region
    _
  $region21: #{tpu_custom_call.1} parent=0 // pred_fallthru
    _
  // Predicated region
  $region22: #{tpu_custom_call.1} parent=0 // pred_check
    _
  $region23: #{tpu_custom_call.1} parent=0 // pred_check_branch
    %77 = sbr.rel (0) target = $region25
  $region24: #{tpu_custom_call.1} parent=0 // pred_region
    _
  $region25: #{tpu_custom_call.1} parent=0 // pred_fallthru
    _

</llo_original>
